<compile_context>
chip_gen: v7x
topology: tpu7x:2x2x1
jax: 0.10.0
libtpu: 0.0.40
codegen_flags: <defaults>
</compile_context>

<pallas_src>
import functools
import math

import jax
import jax.numpy as jnp
from jax.experimental import pallas as pl
from jax.experimental.pallas import tpu as pltpu

_LANE = 128
_SUBLANE = 8


def _cdiv(a, b):
    return -(-a // b)


def _round_up(a, b):
    return _cdiv(a, b) * b


# --------------------------------- kernel ------------------------------------

def _sinusoidal_pos_emb_kernel(x_ref, sfreq_ref, phase_ref, o_ref, *, k,
                               x_is_resident):
    """Writes one lane-dense (block_r, W) output tile, W = k * dim.

    x_ref     : (R_pad, k) resident   -- or (block_r, k) when blocked
    sfreq_ref : (k, W) resident; row q holds freq values inside its own
                dim-wide column group, zeros elsewhere
    phase_ref : (1, W) resident; 0 for sin columns, pi/2 for cos columns
    o_ref     : (block_r, W) output tile
    """
    block_r = o_ref.shape[0]

    if x_is_resident:
        start = pl.multiple_of(pl.program_id(0) * block_r, block_r)
        xb = x_ref[pl.ds(start, block_r), :]          # (block_r, k)
    else:
        xb = x_ref[...]                               # (block_r, k)

    s = sfreq_ref[...]                                # (k, W)

    # arg[r, c] = x[r, c // dim] * freq[c % dim] + phase[c]
    # (pure VPU lane/sublane broadcasts; the masked rows of s make the short
    #  static sum an exact selection, no MXU / no gather needed)
    arg = phase_ref[...] + xb[:, 0:1] * s[0:1, :]
    for q in range(1, k):                             # k is a tiny static int
        arg = arg + xb[:, q:q + 1] * s[q:q + 1, :]

    # single transcendental per element: cos(t) == sin(t + pi/2)
    o_ref[...] = jnp.sin(arg).astype(o_ref.dtype)


# --------------------------------- wrapper -----------------------------------

def sinusoidal_pos_emb(x, dim, *, out_dtype=jnp.float32,
                       target_block_bytes=2 * 1024 * 1024):
    assert dim % 2 == 0 and dim >= 4, "dim must be even and >= 4"
    B = x.shape[0]
    half = dim // 2

    # ---- lane-dense packing: k original rows -> one row of W = k*dim lanes ---
    k = _LANE // math.gcd(dim, _LANE)       # power of two; 1 if dim % 128 == 0
    W = k * dim                             # multiple of 128 -> unmasked stores

    # ---- block / grid selection ----------------------------------------------
    r_needed = _cdiv(B, k)                                     # packed rows
    block_r = max(_SUBLANE,
                  (target_block_bytes // (W * 4)) // _SUBLANE * _SUBLANE)
    block_r = min(block_r, _round_up(r_needed, _SUBLANE))
    grid = _cdiv(r_needed, block_r)
    r_pad = grid * block_r
    b_pad = r_pad * k

    # ---- inputs ---------------------------------------------------------------
    xf = jnp.pad(x.astype(jnp.float32), (0, b_pad - B))
    x_packed = xf.reshape(r_pad, k)                            # (R_pad, k)

    # Frequency-selection matrix + phase row: tiny compile-time constants,
    # DMA'd once and kept resident (no per-step exp / iota / where in-kernel).
    col = jnp.arange(W, dtype=jnp.int32)
    d = col % dim
    j = jnp.where(d < half, d, d - half).astype(jnp.float32)
    freq = jnp.exp(j * jnp.float32(-(math.log(10000.0) / (half - 1))))
    group = col // dim
    qidx = jnp.arange(k, dtype=jnp.int32)[:, None]
    s_freq = jnp.where(group[None, :] == qidx, freq[None, :],
                       0.0).astype(jnp.float32)                # (k, W)
    phase = jnp.where(d < half, 0.0,
                      math.pi / 2.0).astype(jnp.float32)[None, :]   # (1, W)

    # ---- x: resident (single fetch) unless it would be too large for VMEM ----
    x_vmem_bytes = _round_up(r_pad, _SUBLANE) * _LANE * 4      # lane-padded
    x_is_resident = x_vmem_bytes <= 2 * 1024 * 1024
    if x_is_resident:
        x_spec = pl.BlockSpec((r_pad, k), lambda i: (0, 0))
    else:
        x_spec = pl.BlockSpec((block_r, k), lambda i: (i, 0))

    kernel = functools.partial(_sinusoidal_pos_emb_kernel, k=k,
                               x_is_resident=x_is_resident)

    out_packed = pl.pallas_call(
        kernel,
        out_shape=jax.ShapeDtypeStruct((r_pad, W), out_dtype),
        grid=(grid,),
        in_specs=[x_spec,
                  pl.BlockSpec((k, W), lambda i: (0, 0)),
                  pl.BlockSpec((1, W), lambda i: (0, 0))],
        out_specs=pl.BlockSpec((block_r, W), lambda i: (i, 0)),
        compiler_params=pltpu.CompilerParams(
            dimension_semantics=("parallel",)),
    )(x_packed, s_freq, phase)

    # free row-major unpack back to (B, dim), drop padded rows
    return out_packed.reshape(b_pad, dim)[:B]


# ------------------------------ pure-JAX reference ---------------------------

def sinusoidal_pos_emb_ref(x, dim):
    half = dim // 2
    emb = math.log(10000.0) / (half - 1)
    freqs = jnp.exp(jnp.arange(half, dtype=jnp.float32) * -emb)
    args = x[:, None].astype(jnp.float32) * freqs[None, :]
    return jnp.concatenate([jnp.sin(args), jnp.cos(args)], axis=-1)


# ----------------------------------- main ------------------------------------

if __name__ == "__main__":
    key = jax.random.PRNGKey(0)

    cases = [
        dict(B=16, dim=32),                            # dim < 128 -> lane packing
        dict(B=20, dim=256),                           # dim % 128 == 0, padded B
        dict(B=40, dim=32, target_block_bytes=4096),   # forces a multi-step grid
    ]

    for i, c in enumerate(cases):
        kb = jax.random.fold_in(key, i)
        # typical diffusion timesteps: positive scalars of moderate magnitude
        x = jax.random.uniform(kb, (c["B"],), jnp.float32,
                               minval=0.0, maxval=100.0)
        kwargs = {kk: v for kk, v in c.items() if kk not in ("B", "dim")}
        out = jax.block_until_ready(sinusoidal_pos_emb(x, c["dim"], **kwargs))
        ref = jax.block_until_ready(sinusoidal_pos_emb_ref(x, c["dim"]))
        assert out.shape == (c["B"], c["dim"]), out.shape
        err = float(jnp.max(jnp.abs(out - ref)))
        assert err < 2e-4, (c, err)

    print("KERNEL_OK")
</pallas_src>

<mosaic_0001>
module attributes {stable_mosaic.version = 11 : i64} {
  func.func @_sinusoidal_pos_emb_kernel(%arg0: i32, %arg1: memref<8x4xf32, #tpu.memory_space<vmem>>, %arg2: memref<4x128xf32, #tpu.memory_space<vmem>>, %arg3: memref<1x128xf32, #tpu.memory_space<vmem>>, %arg4: memref<8x128xf32, #tpu.memory_space<vmem>>) attributes {dimension_semantics = [#tpu.dimension_semantics<parallel>], iteration_bounds = array<i64: 1>, scalar_prefetch = 0 : i64, scratch_operands = 0 : i64, tpu.core_type = #tpu.core_type<tc>, window_params = [{pipeline_mode = #tpu.pipeline_mode<synchronous>, transform_indices = @transform_0, window_bounds = array<i64: 8, 4>}, {pipeline_mode = #tpu.pipeline_mode<synchronous>, transform_indices = @transform_1, window_bounds = array<i64: 4, 128>}, {pipeline_mode = #tpu.pipeline_mode<synchronous>, transform_indices = @transform_2, window_bounds = array<i64: 1, 128>}, {transform_indices = @transform_3, window_bounds = array<i64: 8, 128>}]} {
    %c8_i32 = arith.constant 8 : i32
    %0 = arith.muli %arg0, %c8_i32 : i32
    %1 = tpu.assume_multiple %0, 8 : i32
    %2 = arith.index_cast %1 : i32 to index
    %c0 = arith.constant 0 : index
    %3 = vector.load %arg1[%2, %c0] : memref<8x4xf32, #tpu.memory_space<vmem>>, vector<8x4xf32>
    %c0_0 = arith.constant 0 : index
    %c0_1 = arith.constant 0 : index
    %4 = vector.load %arg2[%c0_0, %c0_1] : memref<4x128xf32, #tpu.memory_space<vmem>>, vector<4x128xf32>
    %c0_2 = arith.constant 0 : index
    %c0_3 = arith.constant 0 : index
    %5 = vector.load %arg3[%c0_2, %c0_3] : memref<1x128xf32, #tpu.memory_space<vmem>>, vector<1x128xf32>
    %6 = vector.extract_strided_slice %3 {offsets = [0, 0], sizes = [8, 1], strides = [1, 1]} : vector<8x4xf32> to vector<8x1xf32>
    %7 = vector.extract_strided_slice %4 {offsets = [0, 0], sizes = [1, 128], strides = [1, 1]} : vector<4x128xf32> to vector<1x128xf32>
    %8 = vector.broadcast %6 : vector<8x1xf32> to vector<8x128xf32>
    %9 = vector.broadcast %7 : vector<1x128xf32> to vector<8x128xf32>
    %10 = arith.mulf %8, %9 : vector<8x128xf32>
    %11 = vector.broadcast %5 : vector<1x128xf32> to vector<8x128xf32>
    %12 = arith.addf %11, %10 : vector<8x128xf32>
    %13 = vector.extract_strided_slice %3 {offsets = [0, 1], sizes = [8, 1], strides = [1, 1]} : vector<8x4xf32> to vector<8x1xf32>
    %14 = vector.extract_strided_slice %4 {offsets = [1, 0], sizes = [1, 128], strides = [1, 1]} : vector<4x128xf32> to vector<1x128xf32>
    %15 = vector.broadcast %13 : vector<8x1xf32> to vector<8x128xf32>
    %16 = vector.broadcast %14 : vector<1x128xf32> to vector<8x128xf32>
    %17 = arith.mulf %15, %16 : vector<8x128xf32>
    %18 = arith.addf %12, %17 : vector<8x128xf32>
    %19 = vector.extract_strided_slice %3 {offsets = [0, 2], sizes = [8, 1], strides = [1, 1]} : vector<8x4xf32> to vector<8x1xf32>
    %20 = vector.extract_strided_slice %4 {offsets = [2, 0], sizes = [1, 128], strides = [1, 1]} : vector<4x128xf32> to vector<1x128xf32>
    %21 = vector.broadcast %19 : vector<8x1xf32> to vector<8x128xf32>
    %22 = vector.broadcast %20 : vector<1x128xf32> to vector<8x128xf32>
    %23 = arith.mulf %21, %22 : vector<8x128xf32>
    %24 = arith.addf %18, %23 : vector<8x128xf32>
    %25 = vector.extract_strided_slice %3 {offsets = [0, 3], sizes = [8, 1], strides = [1, 1]} : vector<8x4xf32> to vector<8x1xf32>
    %26 = vector.extract_strided_slice %4 {offsets = [3, 0], sizes = [1, 128], strides = [1, 1]} : vector<4x128xf32> to vector<1x128xf32>
    %27 = vector.broadcast %25 : vector<8x1xf32> to vector<8x128xf32>
    %28 = vector.broadcast %26 : vector<1x128xf32> to vector<8x128xf32>
    %29 = arith.mulf %27, %28 : vector<8x128xf32>
    %30 = arith.addf %24, %29 : vector<8x128xf32>
    %31 = math.sin %30 : vector<8x128xf32>
    %c0_4 = arith.constant 0 : index
    %c0_5 = arith.constant 0 : index
    %32 = vector.load %arg4[%c0_4, %c0_5] : memref<8x128xf32, #tpu.memory_space<vmem>>, vector<8x128xf32>
    tpu.vector_store %arg4[%c0_4, %c0_5], %31 {strides = array<i32>} : memref<8x128xf32, #tpu.memory_space<vmem>>, vector<8x128xf32>,
    return
  }
  func.func @transform_0(%arg0: i32) -> (i32, i32) {
    %c0_i32 = arith.constant 0 : i32
    %c0_i32_0 = arith.constant 0 : i32
    %c0_i32_1 = arith.constant 0 : i32
    return %c0_i32, %c0_i32_0 : i32, i32
  }
  func.func @transform_1(%arg0: i32) -> (i32, i32) {
    %c0_i32 = arith.constant 0 : i32
    %c0_i32_0 = arith.constant 0 : i32
    %c0_i32_1 = arith.constant 0 : i32
    return %c0_i32, %c0_i32_0 : i32, i32
  }
  func.func @transform_2(%arg0: i32) -> (i32, i32) {
    %c0_i32 = arith.constant 0 : i32
    %c0_i32_0 = arith.constant 0 : i32
    %c0_i32_1 = arith.constant 0 : i32
    return %c0_i32, %c0_i32_0 : i32, i32
  }
  func.func @transform_3(%arg0: i32) -> (i32, i32) {
    %c0_i32 = arith.constant 0 : i32
    %c0_i32_0 = arith.constant 0 : i32
    return %arg0, %c0_i32 : i32, i32
  }
}

</mosaic_0001>

<llo_original>
// kernel: tpu_custom_call.1
$region0: #{tpu_custom_call.1}
  #allocation0 [shape = 'u32[]', space=smem, size = 0x4, offset = 0x4, fixed_abs, tag = 'smem constant byte address 0x4 - core index']
  #allocation1 [shape = 'u32[144,128]{1,0:T(1,128)}', space=vmem, size = 0x12000, scoped, tag = 'internal scratch']
  %s0 = inlined_call_operand.vmem [shape: f32[8,4], index: 0, kind: input, shape index: {}]
  %s1 = inlined_call_operand.vmem [shape: f32[4,128], index: 1, kind: input, shape index: {}]
  %s2 = inlined_call_operand.vmem [shape: f32[1,128], index: 2, kind: input, shape index: {}]
  %s3 = inlined_call_operand.hbm [shape: f32[8,128], index: 3, kind: output, shape index: {}]
  %s4 = sld [smem:[#allocation0]]
  $region22: #{tpu_custom_call.1} parent=0
    _
  %s6 = ssub.s32 1, %s4
  %s7 = scalar_select 0, %s6, %s4
  $region1: #{tpu_custom_call.1} parent=0
    #allocation2 [shape = 'u8[4096]{0}', space=vmem, size = 0x1000, scoped, tag = 'output window, operand 0, single buffered']
    #allocation3 [shape = 's32[1]{0}', space=sflag, size = 0x4, scoped, tag = 'scoped memory for tpu_custom_call.1']
    %8 = vsyncpa [#allocation3], 0
    // Predicated region
    $region2: #{tpu_custom_call.1} parent=1 // pred_check
      _
    $region3: #{tpu_custom_call.1} parent=1 // pred_check_branch
      %10 = sbr.rel (0) target = $region5
    $region4: #{tpu_custom_call.1} parent=1 // pred_region
      _
    $region5: #{tpu_custom_call.1} parent=1 // pred_fallthru
      _
    // Predicated region
    $region6: #{tpu_custom_call.1} parent=1 // pred_check
      _
    $region7: #{tpu_custom_call.1} parent=1 // pred_check_branch
      %12 = sbr.rel (0) target = $region9
    $region8: #{tpu_custom_call.1} parent=1 // pred_region
      _
    $region9: #{tpu_custom_call.1} parent=1 // pred_fallthru
      _
    // Predicated region
    $region10: #{tpu_custom_call.1} parent=1 // pred_check
      _
    $region11: #{tpu_custom_call.1} parent=1 // pred_check_branch
      %14 = sbr.rel (0) target = $region13
    $region12: #{tpu_custom_call.1} parent=1 // pred_region
      _
    $region13: #{tpu_custom_call.1} parent=1 // pred_fallthru
      _
    %s15 = smul.u32 0, 8
    %s16 = scalar_lea.vmem %s0, %s15
    %v17 = vld [vmem:[%s16] sm:$0xff]
    %v18 = vld [vmem:[%s1] sm:$0xf]
    %v19 = vld [vmem:[%s2] sm:$0x1]
    %21 = vset.pattern.permute.xlu0 0
    %22 = vperm.xlu0 %21, %v17
    %v23 = vpop.permute.xlu0 %22
    %v25 = vlaneseq
    %v26 = vshrl.u32 %v25, 7
    %v27 = vsub.s32 0, %v26
    %v28 = vrot.slane %v18, %v27
    %v29 = vmul.f32 %v23, %v28
    %v31 = vlaneseq
    %v32 = vshrl.u32 %v31, 7
    %v33 = vsub.s32 0, %v32
    %v34 = vrot.slane %v19, %v33
    %v36 = vadd.f32 %v34, %v29
    %37 = vset.pattern.permute.xlu0 1
    %38 = vperm.xlu0 %37, %v17
    %v39 = vpop.permute.xlu0 %38
    %v41 = vlaneseq
    %v42 = vshrl.u32 %v41, 7
    %v43 = vsub.s32 1, %v42
    %v44 = vrot.slane %v18, %v43
    %v45 = vmul.f32 %v39, %v44
    %v46 = vadd.f32 %v36, %v45
    %47 = vset.pattern.permute.xlu0 2
    %48 = vperm.xlu0 %47, %v17
    %v49 = vpop.permute.xlu0 %48
    %v51 = vlaneseq
    %v52 = vshrl.u32 %v51, 7
    %v53 = vsub.s32 2, %v52
    %v54 = vrot.slane %v18, %v53
    %v55 = vmul.f32 %v49, %v54
    %v56 = vadd.f32 %v46, %v55
    %57 = vset.pattern.permute.xlu0 3
    %58 = vperm.xlu0 %57, %v17
    %v59 = vpop.permute.xlu0 %58
    %v61 = vlaneseq
    %v62 = vshrl.u32 %v61, 7
    %v63 = vsub.s32 3, %v62
    %v64 = vrot.slane %v18, %v63
    %v65 = vmul.f32 %v59, %v64
    %v66 = vadd.f32 %v56, %v65
    %v67 = vand.u32 2147483647, %v66
    %vm68 = vcmp.le.f32.partialorder %v67, 0.7853982
    %vm69 = vcmp.lt.s32.totalorder %v66, 0
    %v70 = vand.u32 %v66, 2139095040
    %v71 = vshrl.u32 %v70, 23
    %v72 = vsub.s32 %v71, 127
    %v73 = vand.u32 2147483647, %v66
    %v74 = vand.u32 %v73, 8388607
    %v75 = vor.u32 %v74, 8388608
    %v76 = vsub.s32 0, %v75
    %v77 = vadd.s32 %v72, 1
    %vm78 = vcmp.gt.s32.totalorder %v77, 0
    %v79 = vsel %vm78, %v77, 0
    %v80 = vshrl.u32 %v79, 5
    %v81 = vand.u32 %v79, 31
    %v82 = vsub.s32 32, %v81
    %v83 = vshrl.u32 683565275, %v82
    %v84 = vshll.u32 683565275, %v81
    %v85 = vshrl.u32 2475754826, %v82
    %v86 = vor.u32 %v84, %v85
    %v87 = vshll.u32 2475754826, %v81
    %v88 = vshrl.u32 2131351028, %v82
    %v89 = vor.u32 %v87, %v88
    %v90 = vshll.u32 2131351028, %v81
    %v91 = vshrl.u32 2102212464, %v82
    %v92 = vor.u32 %v90, %v91
    %v93 = vshll.u32 2102212464, %v81
    %v94 = vshrl.u32 920167782, %v82
    %v95 = vor.u32 %v93, %v94
    %v96 = vshll.u32 920167782, %v81
    %v97 = vshrl.u32 1326507024, %v82
    %v98 = vor.u32 %v96, %v97
    %vm99 = vcmp.lt.s32.totalorder %v80, 1
    %vm100 = vcmp.lt.s32.totalorder %v80, 2
    %vm101 = vcmp.lt.s32.totalorder %v80, 3
    %vm102 = vcmp.lt.s32.totalorder %v80, 4
    %v103 = vsel %vm99, %v83, %v86
    %v104 = vsel %vm102, %v92, 2102212464
    %v105 = vsel %vm101, %v89, %v104
    %v106 = vsel %vm100, %v103, %v105
    %v107 = vsel %vm99, %v86, %v89
    %v108 = vsel %vm102, %v95, 920167782
    %v109 = vsel %vm101, %v92, %v108
    %v110 = vsel %vm100, %v107, %v109
    %v111 = vsel %vm99, %v89, %v92
    %v112 = vsel %vm102, %v98, 1326507024
    %v113 = vsel %vm101, %v95, %v112
    %v114 = vsel %vm100, %v111, %v113
    %v115 = vshll.u32 %v75, 8
    %v116 = vmul.u32.u64.compose %v115, %v114
    %v117 = vextract.low.u32 %v116
    %v118 = vextract.high.u32 %v116
    %v119 = vmul.u32.u64.compose %v115, %v110
    %v120 = vextract.low.u32 %v119
    %v121 = vextract.high.u32 %v119
    %v122 = vmul.u32 %v115, %v106
    %v123 = vadd.s32 %v118, %v120
    %vm124 = vc.u32 %v118, %v120
    %v125 = vadd.s32 %v121, 1
    %v126 = vsel %vm124, %v125, %v121
    %v127 = vadd.s32 %v122, %v126
    %v128 = vadd.s32 %v127, 536870912
    %v129 = vshrl.u32 %v128, 30
    %v130 = vshll.u32 %v129, 30
    %v131 = vsub.s32 %v127, %v130
    %vm132 = vcmp.lt.s32.totalorder %v131, 0
    %v133 = vsub.s32 0, %v131
    %v134 = vsel %vm132, %v133, %v131
    %v135 = vclz %v134
    %v136 = vsub.s32 %v135, 2
    %vm137 = vcmp.gt.s32.totalorder 0, %v136
    %v138 = vsel %vm137, 0, %v136
    %v139 = vsub.s32 32, %v138
    %v140 = vshll.u32 %v131, %v138
    %v141 = vshrl.u32 %v123, %v139
    %v142 = vor.u32 %v140, %v141
    %v143 = vsub.s32 4294967266, %v138
    %v144 = vadd.s32 %v143, 127
    %v145 = vshll.u32 %v144, 23
    %v146 = vor.u32 4788187, %v145
    %v147 = vand.u32 2147483647, %v146
    %v149 = vcvt.s32.f32 %v142
    %v150 = vmul.f32 %v149, %v147
    %v151 = vxor.u32 %v150, 2147483648
    %v152 = vsel %vm69, %v151, %v150
    %v153 = vsub.s32 4, %v129
    %v154 = vsel %vm69, %v153, %v129
    %v155 = vsel %vm68, %v66, %v152
    %v156 = vsel %vm68, 0, %v154
    %v157 = vcosq.f32.pop %v155
    %v158 = vsinq.f32.pop %v155
    %vm159 = vweird.f32 %v66
    %v160 = vadd.s32 %v156, 3
    %v161 = vand.u32 %v160, 3
    %vm162 = vcmp.lt.s32.totalorder %v161, 2
    %vm163 = vcmp.eq.s32.totalorder %v161, 0
    %v164 = vxor.u32 %v158, 2147483648
    %v165 = vsel %vm163, %v157, %v164
    %vm166 = vcmp.eq.s32.totalorder %v161, 2
    %v167 = vxor.u32 %v157, 2147483648
    %v168 = vsel %vm166, %v167, %v158
    %v169 = vsel %vm162, %v165, %v168
    %v170 = vsel %vm159, nan, %v169
    %171 = vst [vmem:[#allocation2] sm:$0xff] %v170
    // Predicated region
    $region14: #{tpu_custom_call.1} parent=1 // pred_check
      _
    $region15: #{tpu_custom_call.1} parent=1 // pred_check_branch
      %173 = sbr.rel (0) target = $region17
    $region16: #{tpu_custom_call.1} parent=1 // pred_region
      %s175 = ssub.s32 128, 128
      %176 = vsyncadd [#allocation3], %s175
      %s178 = sshll.u32 [#allocation2], 4
      %s179 = int_to_ptr.vmem [resolvable:$true] %s178
      %181 = dma.vmem_to_hbm [thread:$0]  %s179, 128, %s3, [#allocation3]
    $region17: #{tpu_custom_call.1} parent=1 // pred_fallthru
      _
    // Predicated region
    $region18: #{tpu_custom_call.1} parent=1 // pred_check
      _
    $region19: #{tpu_custom_call.1} parent=1 // pred_check_branch
      %183 = sbr.rel (0) target = $region21
    $region20: #{tpu_custom_call.1} parent=1 // pred_region
      %184 = dma.done [#allocation3], 128
    $region21: #{tpu_custom_call.1} parent=1 // pred_fallthru
      _
    %185 = vsyncpa [#allocation3], 1

</llo_original>
